<compile_context>
chip_gen: v7x
topology: tpu7x:2x2x1
jax: 0.10.0
libtpu: 0.0.40
codegen_flags: <defaults>
</compile_context>

<pallas_src>
import functools

import jax
import jax.numpy as jnp
from jax.experimental import pallas as pl
from jax.experimental.pallas import tpu as pltpu


# ---------------------------------------------------------------------------
# Kernels
# ---------------------------------------------------------------------------

def _gen_kernel_single(x_ref, w_ref, b_ref, o_ref):
    """Small-vocab path: whole (padded) vocab resident in one lane-dense tile."""
    x = x_ref[...].astype(w_ref.dtype)                       # in-kernel cast
    logits = jnp.dot(x, w_ref[...], preferred_element_type=jnp.float32)
    logits = logits + b_ref[...]
    # Numerically-stable log-softmax along the vocab (lane) axis, all f32.
    m = jnp.max(logits, axis=-1, keepdims=True)              # XLU
    shifted = logits - m
    lse = jnp.log(jnp.sum(jnp.exp(shifted), axis=-1, keepdims=True))  # EUP+XLU
    o_ref[...] = (shifted - lse).astype(o_ref.dtype)


def _gen_kernel_tiled(x_ref, w_ref, b_ref, o_ref, m_sc, l_sc):
    """Large-vocab path: grid = (M tiles, 2 passes, vocab tiles).

    Pass 0: stream weight over vocab tiles, keep running (max, sum-exp) per
    row in VMEM scratch; fold into the row logsumexp at the last vocab tile.
    Pass 1: re-stream the weight, recompute the logits and write
    `logits - lse` per vocab tile (lane-dense stores).
    """
    p = pl.program_id(1)
    v = pl.program_id(2)
    nv = pl.num_programs(2)

    x = x_ref[...].astype(w_ref.dtype)
    logits = jnp.dot(x, w_ref[...], preferred_element_type=jnp.float32)
    logits = logits + b_ref[...]

    @pl.when((p == 0) & (v == 0))
    def _():
        m_sc[...] = jnp.full(m_sc.shape, -jnp.inf, m_sc.dtype)
        l_sc[...] = jnp.zeros(l_sc.shape, l_sc.dtype)

    @pl.when(p == 0)
    def _():
        m_prev = m_sc[...]
        m_new = jnp.maximum(m_prev, jnp.max(logits, axis=-1, keepdims=True))
        l_sc[...] = (l_sc[...] * jnp.exp(m_prev - m_new)
                     + jnp.sum(jnp.exp(logits - m_new), axis=-1, keepdims=True))
        m_sc[...] = m_new

    @pl.when((p == 0) & (v == nv - 1))
    def _():
        m_sc[...] = m_sc[...] + jnp.log(l_sc[...])   # m_sc now holds the lse

    @pl.when(p == 1)
    def _():
        o_ref[...] = (logits - m_sc[...]).astype(o_ref.dtype)


# ---------------------------------------------------------------------------
# Parameter prep & tiling helpers
# ---------------------------------------------------------------------------

def prepare_generator_params(weight, bias, compute_dtype=jnp.bfloat16):
    """One-time prep (outside the hot path).

    PyTorch (vocab, d_model) weight -> (d_model, vocab_padded) in the MXU
    compute dtype; bias -> (1, vocab_padded) f32.  vocab is padded up to a
    multiple of 128 with zero weight columns and a large *finite* negative
    bias so pad columns never perturb the log-softmax and the output store
    stays lane-dense.  Returns (w_t, b2d, vocab).
    """
    w = jnp.asarray(weight)
    b = jnp.asarray(bias)
    vocab, d_model = w.shape
    vocab_p = ((vocab + 127) // 128) * 128
    w_t = w.T.astype(compute_dtype)                      # (d_model, vocab)
    b2d = b.reshape(1, -1).astype(jnp.float32)
    if vocab_p != vocab:
        w_t = jnp.pad(w_t, ((0, 0), (0, vocab_p - vocab)))
        b2d = jnp.pad(b2d, ((0, 0), (0, vocab_p - vocab)),
                      constant_values=-1e9)              # finite, not -inf
    return w_t, b2d, vocab


def _pick_bm(m, block_m):
    """M tile: multiple of 16 (bf16 sublane packing), snapped to a friendly
    size (default 256 = full MXU height on v6e/v7x) and small enough to give
    the parallel M axis >= 2 steps for v7x's two TensorCores."""
    def snap(n):
        for c in (16, 32, 64, 128, 256):
            if c >= n:
                return c
        return 256
    bm = min(max(16, block_m), snap(m))
    if m > 16 and pl.cdiv(m, bm) < 2:
        bm = min(bm, snap((m + 1) // 2))
    return bm


def _pick_tv(vocab_p, block_v):
    """Largest multiple of 128 that divides vocab_p and is <= block_v, so no
    ragged vocab tile ever feeds garbage columns into the row statistics."""
    n = vocab_p // 128
    cap = max(1, block_v // 128)
    best = 1
    for k in range(1, min(n, cap) + 1):
        if n % k == 0:
            best = k
    return best * 128


def _vmem_limit_bytes():
    """~0.75x of physical per-core VMEM (v5e/v6e -> 96 MiB, v7x -> 48 MiB);
    fall back to the compiler default if the query is unavailable."""
    try:
        cap = int(pltpu.get_tpu_info().vmem_capacity_bytes)
        return (cap * 3) // 4
    except Exception:
        return None


# ---------------------------------------------------------------------------
# Forward
# ---------------------------------------------------------------------------

@functools.partial(jax.jit,
                   static_argnames=("vocab", "block_m", "block_v", "out_dtype"))
def generator_forward(x, w_t, b2d, *, vocab=None, block_m=256, block_v=1024,
                      out_dtype=jnp.float32):
    """x: (..., d_model); w_t: (d_model, vocab_p); b2d: (1, vocab_p) f32.
    out_dtype=jnp.bfloat16 halves the dominant output HBM stream when the
    consumer tolerates it."""
    d_model, vocab_p = w_t.shape
    if vocab is None:
        vocab = vocab_p
    lead_shape = x.shape[:-1]

    # No wrapper-side pad / cast / slice of x.
    x2d = x.reshape(-1, d_model)
    m = x2d.shape[0]

    bm = _pick_bm(m, block_m)
    tv = _pick_tv(vocab_p, max(128, block_v))
    nm = pl.cdiv(m, bm)
    nv = vocab_p // tv

    out_bytes = jnp.dtype(out_dtype).itemsize
    vmem_limit = _vmem_limit_bytes()

    if nv == 1:
        # Whole (padded) vocab fits one lane-dense tile: single pass, weight
        # stays resident across the M grid.
        cost = pl.CostEstimate(
            flops=2 * m * d_model * vocab_p,
            transcendentals=m * vocab_p,
            bytes_accessed=(x2d.size * x2d.dtype.itemsize
                            + w_t.size * w_t.dtype.itemsize
                            + m * vocab_p * out_bytes))
        out = pl.pallas_call(
            _gen_kernel_single,
            out_shape=jax.ShapeDtypeStruct((m, vocab_p), out_dtype),
            grid_spec=pltpu.PrefetchScalarGridSpec(
                num_scalar_prefetch=0,
                grid=(nm,),
                in_specs=[
                    pl.BlockSpec((bm, d_model), lambda i: (i, 0)),
                    pl.BlockSpec((d_model, vocab_p), lambda i: (0, 0)),
                    pl.BlockSpec((1, vocab_p), lambda i: (0, 0)),
                ],
                out_specs=pl.BlockSpec((bm, vocab_p), lambda i: (i, 0)),
            ),
            compiler_params=pltpu.CompilerParams(
                dimension_semantics=("parallel",),
                vmem_limit_bytes=vmem_limit),
            cost_estimate=cost,
        )(x2d, w_t, b2d)
    else:
        # Large vocab: stream the weight over vocab tiles (last axis,
        # "arbitrary") with an online log-softmax over two vocab passes.
        # TODO(synk): on v5e/v6e (128 MiB VMEM) a resident-weight variant that
        # chunks only the logits over vocab would save the second weight
        # stream when d_model*vocab_p*2B fits; kept one streamed path here.
        cost = pl.CostEstimate(
            flops=2 * 2 * m * d_model * vocab_p,
            transcendentals=m * vocab_p,
            bytes_accessed=(x2d.size * x2d.dtype.itemsize
                            + 2 * nm * w_t.size * w_t.dtype.itemsize
                            + m * vocab_p * out_bytes))
        out = pl.pallas_call(
            _gen_kernel_tiled,
            out_shape=jax.ShapeDtypeStruct((m, vocab_p), out_dtype),
            grid_spec=pltpu.PrefetchScalarGridSpec(
                num_scalar_prefetch=0,
                grid=(nm, 2, nv),
                in_specs=[
                    pl.BlockSpec((bm, d_model), lambda i, p, v: (i, 0)),
                    pl.BlockSpec((d_model, tv), lambda i, p, v: (0, v)),
                    pl.BlockSpec((1, tv), lambda i, p, v: (0, v)),
                ],
                # During the stats pass (p=0) the output block stays parked at
                # (i, 0) -- never written, never flushed; during the write
                # pass (p=1) it follows the vocab tile -> lane-dense stores.
                out_specs=pl.BlockSpec((bm, tv), lambda i, p, v: (i, v * p)),
                scratch_shapes=[pltpu.VMEM((bm, 1), jnp.float32),   # row max / lse
                                pltpu.VMEM((bm, 1), jnp.float32)],  # row sum-exp
            ),
            compiler_params=pltpu.CompilerParams(
                dimension_semantics=("parallel", "arbitrary", "arbitrary"),
                vmem_limit_bytes=vmem_limit),
            cost_estimate=cost,
        )(x2d, w_t, b2d)

    out = out.reshape(*lead_shape, vocab_p)
    if vocab_p != vocab:
        out = out[..., :vocab]   # only taken for non-128-multiple vocabs
    return out


# ---------------------------------------------------------------------------
# Self-test
# ---------------------------------------------------------------------------

if __name__ == "__main__":
    batch, seq, d_model = 2, 8, 32
    key = jax.random.PRNGKey(0)
    kx, kw, kb = jax.random.split(key, 3)
    x = jax.random.normal(kx, (batch, seq, d_model), dtype=jnp.float32)

    def check(vocab, block_v):
        bound = 1.0 / (d_model ** 0.5)
        w = jax.random.uniform(jax.random.fold_in(kw, vocab),
                               (vocab, d_model), jnp.float32, -bound, bound)
        b = jax.random.uniform(jax.random.fold_in(kb, vocab),
                               (vocab,), jnp.float32, -bound, bound)

        w_t, b2d, v_orig = prepare_generator_params(w, b)
        out = generator_forward(x, w_t, b2d, vocab=v_orig, block_v=block_v)
        out = jax.block_until_ready(out)

        # Reference with the same bf16 inputs / f32 accumulation.
        x_q = x.astype(jnp.bfloat16).astype(jnp.float32)
        w_q = w.astype(jnp.bfloat16).astype(jnp.float32)
        ref = jax.nn.log_softmax(x_q @ w_q.T + b, axis=-1)

        assert out.shape == (batch, seq, vocab), out.shape
        assert jnp.allclose(out, ref, atol=1e-3, rtol=1e-3), \
            f"mismatch vs reference (vocab={vocab}, block_v={block_v})"

    check(vocab=128, block_v=1024)   # single-pass (vocab-resident) path
    check(vocab=512, block_v=128)    # streamed two-pass online-softmax path
    check(vocab=200, block_v=1024)   # non-128-multiple vocab -> padded lanes

    print("KERNEL_OK")
</pallas_src>

<mosaic_0001>
module attributes {stable_mosaic.version = 11 : i64} {
  func.func @_gen_kernel_single(%arg0: i32, %arg1: memref<16x32xf32, #tpu.memory_space<vmem>>, %arg2: memref<32x128xbf16, #tpu.memory_space<vmem>>, %arg3: memref<1x128xf32, #tpu.memory_space<vmem>>, %arg4: memref<16x128xf32, #tpu.memory_space<vmem>>) attributes {dimension_semantics = [#tpu.dimension_semantics<parallel>], iteration_bounds = array<i64: 1>, scalar_prefetch = 0 : i64, scratch_operands = 0 : i64, tpu.core_type = #tpu.core_type<tc>, window_params = [{transform_indices = @transform_0, window_bounds = array<i64: 16, 32>}, {pipeline_mode = #tpu.pipeline_mode<synchronous>, transform_indices = @transform_1, window_bounds = array<i64: 32, 128>}, {pipeline_mode = #tpu.pipeline_mode<synchronous>, transform_indices = @transform_2, window_bounds = array<i64: 1, 128>}, {transform_indices = @transform_3, window_bounds = array<i64: 16, 128>}]} {
    %c0 = arith.constant 0 : index
    %c0_0 = arith.constant 0 : index
    %0 = vector.load %arg1[%c0, %c0_0] : memref<16x32xf32, #tpu.memory_space<vmem>>, vector<16x32xf32>
    %1 = arith.truncf %0 : vector<16x32xf32> to vector<16x32xbf16>
    %c0_1 = arith.constant 0 : index
    %c0_2 = arith.constant 0 : index
    %2 = vector.load %arg2[%c0_1, %c0_2] : memref<32x128xbf16, #tpu.memory_space<vmem>>, vector<32x128xbf16>
    %cst = arith.constant dense<0.000000e+00> : vector<16x128xf32>
    %3 = tpu.matmul %1, %2, %cst {dimension_numbers = #tpu.dot_dimension_numbers<[1], [0], [0], [1], [0, 0, 1, 1], [], []>} : vector<16x32xbf16>, vector<32x128xbf16>, vector<16x128xf32> -> vector<16x128xf32>
    %c0_3 = arith.constant 0 : index
    %c0_4 = arith.constant 0 : index
    %4 = vector.load %arg3[%c0_3, %c0_4] : memref<1x128xf32, #tpu.memory_space<vmem>>, vector<1x128xf32>
    %5 = vector.broadcast %4 : vector<1x128xf32> to vector<16x128xf32>
    %6 = arith.addf %3, %5 : vector<16x128xf32>
    %cst_5 = arith.constant dense<0xFF800000> : vector<16xf32>
    %7 = vector.multi_reduction <maximumf>, %6, %cst_5 [1] : vector<16x128xf32> to vector<16xf32>
    %8 = vector.shape_cast %7 : vector<16xf32> to vector<16x1xf32>
    %9 = vector.broadcast %8 : vector<16x1xf32> to vector<16x128xf32>
    %10 = arith.subf %6, %9 : vector<16x128xf32>
    %11 = math.exp %10 : vector<16x128xf32>
    %cst_6 = arith.constant dense<0.000000e+00> : vector<16xf32>
    %12 = vector.multi_reduction <add>, %11, %cst_6 [1] : vector<16x128xf32> to vector<16xf32>
    %13 = vector.shape_cast %12 : vector<16xf32> to vector<16x1xf32>
    %14 = math.log %13 : vector<16x1xf32>
    %15 = vector.broadcast %14 : vector<16x1xf32> to vector<16x128xf32>
    %16 = arith.subf %10, %15 : vector<16x128xf32>
    %c0_7 = arith.constant 0 : index
    %c0_8 = arith.constant 0 : index
    %17 = vector.load %arg4[%c0_7, %c0_8] : memref<16x128xf32, #tpu.memory_space<vmem>>, vector<16x128xf32>
    tpu.vector_store %arg4[%c0_7, %c0_8], %16 {strides = array<i32>} : memref<16x128xf32, #tpu.memory_space<vmem>>, vector<16x128xf32>,
    return
  }
  func.func @transform_0(%arg0: i32) -> (i32, i32) {
    %c0_i32 = arith.constant 0 : i32
    %c0_i32_0 = arith.constant 0 : i32
    return %arg0, %c0_i32 : i32, i32
  }
  func.func @transform_1(%arg0: i32) -> (i32, i32) {
    %c0_i32 = arith.constant 0 : i32
    %c0_i32_0 = arith.constant 0 : i32
    %c0_i32_1 = arith.constant 0 : i32
    return %c0_i32, %c0_i32_0 : i32, i32
  }
  func.func @transform_2(%arg0: i32) -> (i32, i32) {
    %c0_i32 = arith.constant 0 : i32
    %c0_i32_0 = arith.constant 0 : i32
    %c0_i32_1 = arith.constant 0 : i32
    return %c0_i32, %c0_i32_0 : i32, i32
  }
  func.func @transform_3(%arg0: i32) -> (i32, i32) {
    %c0_i32 = arith.constant 0 : i32
    %c0_i32_0 = arith.constant 0 : i32
    return %arg0, %c0_i32 : i32, i32
  }
}

</mosaic_0001>

<llo_original>
// kernel: generator_forward.1
$region0: #{generator_forward.1}
  #allocation0 [shape = 'u32[]', space=smem, size = 0x4, offset = 0x4, fixed_abs, tag = 'smem constant byte address 0x4 - core index']
  #allocation1 [shape = 'u32[144,128]{1,0:T(1,128)}', space=vmem, size = 0x12000, scoped, tag = 'internal scratch']
  %s0 = inlined_call_operand.hbm [shape: f32[16,32], index: 0, kind: input, shape index: {}]
  %s1 = inlined_call_operand.hbm [shape: bf16[32,128], index: 1, kind: input, shape index: {}]
  %s2 = inlined_call_operand.vmem [shape: f32[1,128], index: 2, kind: input, shape index: {}]
  %s3 = inlined_call_operand.hbm [shape: f32[16,128], index: 3, kind: output, shape index: {}]
  %s4 = sld [smem:[#allocation0]]
  $region30: #{generator_forward.1} parent=0
    _
  %s6 = ssub.s32 1, %s4
  %s7 = scalar_select 0, %s6, %s4
  $region1: #{generator_forward.1} parent=0
    #allocation2 [shape = 'u8[8192]{0}', space=vmem, size = 0x2000, scoped, tag = 'input window, operand 0, single buffered']
    #allocation3 [shape = 's32[1]{0}', space=sflag, size = 0x4, scoped, tag = 'scoped memory for generator_forward.1']
    #allocation4 [shape = 's32[1]{0}', space=sflag, size = 0x4, scoped, tag = 'scoped memory for generator_forward.1']
    #allocation5 [shape = 'u8[8192]{0}', space=vmem, size = 0x2000, scoped, tag = 'input window, operand 1, single buffered']
    #allocation6 [shape = 's32[1]{0}', space=sflag, size = 0x4, scoped, tag = 'scoped memory for generator_forward.1']
    #allocation7 [shape = 'u8[8192]{0}', space=vmem, size = 0x2000, scoped, tag = 'output window, operand 0, single buffered']
    %8 = vsyncpa [#allocation3], 0
    %9 = vsyncpa [#allocation6], 0
    %10 = vsyncpa [#allocation4], 0
    // Predicated region
    $region2: #{generator_forward.1} parent=1 // pred_check
      _
    $region3: #{generator_forward.1} parent=1 // pred_check_branch
      %12 = sbr.rel (0) target = $region5
    $region4: #{generator_forward.1} parent=1 // pred_region
      %s14 = ssub.s32 256, 256
      %15 = vsyncadd [#allocation3], %s14
      %s16 = sshll.u32 [#allocation2], 4
      %s17 = int_to_ptr.vmem [resolvable:$true] %s16
      %22 = dma.hbm_to_vmem [thread:$0]  %s0, 256, %s17, [#allocation3], 128, 128, 8
    $region5: #{generator_forward.1} parent=1 // pred_fallthru
      _
    // Predicated region
    $region6: #{generator_forward.1} parent=1 // pred_check
      _
    $region7: #{generator_forward.1} parent=1 // pred_check_branch
      %24 = sbr.rel (0) target = $region9
    $region8: #{generator_forward.1} parent=1 // pred_region
      %s26 = ssub.s32 256, 256
      %27 = vsyncadd [#allocation6], %s26
      %s28 = sshll.u32 [#allocation5], 4
      %s29 = int_to_ptr.vmem [resolvable:$true] %s28
      %34 = dma.hbm_to_vmem [thread:$0]  %s1, 256, %s29, [#allocation6], 64, 64, 4
    $region9: #{generator_forward.1} parent=1 // pred_fallthru
      _
    // Predicated region
    $region10: #{generator_forward.1} parent=1 // pred_check
      _
    $region11: #{generator_forward.1} parent=1 // pred_check_branch
      %36 = sbr.rel (0) target = $region13
    $region12: #{generator_forward.1} parent=1 // pred_region
      _
    $region13: #{generator_forward.1} parent=1 // pred_fallthru
      _
    // Predicated region
    $region14: #{generator_forward.1} parent=1 // pred_check
      _
    $region15: #{generator_forward.1} parent=1 // pred_check_branch
      %38 = sbr.rel (0) target = $region17
    $region16: #{generator_forward.1} parent=1 // pred_region
      %39 = dma.done [#allocation3], 256
    $region17: #{generator_forward.1} parent=1 // pred_fallthru
      _
    // Predicated region
    $region18: #{generator_forward.1} parent=1 // pred_check
      _
    $region19: #{generator_forward.1} parent=1 // pred_check_branch
      %41 = sbr.rel (0) target = $region21
    $region20: #{generator_forward.1} parent=1 // pred_region
      %42 = dma.done [#allocation6], 256
    $region21: #{generator_forward.1} parent=1 // pred_fallthru
      _
    %v44 = vld [vmem:[#allocation2] sm:$0xff]
    %v45 = vld [vmem:[#allocation2 + $0x8] sm:$0xff]
    %v46 = vpack.c.bf16 %v45, %v44
    %v47 = vld [vmem:[#allocation5] sm:$0xf]
    %v48 = vld [vmem:[#allocation5 + $0x4] sm:$0xf]
    %v49 = vld [vmem:[#allocation5 + $0x8] sm:$0xf]
    %v50 = vld [vmem:[#allocation5 + $0xc] sm:$0xf]
    %v51 = vld [vmem:[%s2] sm:$0x1]
    %v53 = vlaneseq
    %v54 = vshrl.u32 %v53, 7
    %v55 = vsub.s32 0, %v54
    %v56 = vrot.slane %v51, %v55
    %v62 = vunpack.c.l.b16 %v47
    %v63 = vunpack.c.l.b16 %v48
    %v64 = vunpack.c.l.b16 %v49
    %v65 = vunpack.c.l.b16 %v50
    %v66 = vpack.c.b16 %v63, %v62
    %v67 = vpack.c.b16 %v65, %v64
    %vm70 = vcmask 261120
    %v72 = vsel %vm70, %v46, 0
    %74 = vmatprep.subr.bf16.mxu0 0
    %75 = vmatpush1.bf16.msra.mxu0 %v66
    %76 = vmatprep.subr.bf16.mxu0 0
    %77 = vmatpush1.bf16.msra.mxu0 %v67
    %78 = vmatprep.subr.bf16.mxu0 0
    %79 = vmatpush1.bf16.msra.mxu0 0
    %80 = vmatprep.subr.bf16.mxu0 0
    %81 = vmatpush1.bf16.msra.mxu0 0
    %82 = vmatprep.subr.bf16.mxu0 0
    %83 = vmatpush1.bf16.msra.mxu0 0
    %84 = vmatprep.subr.bf16.mxu0 0
    %85 = vmatpush1.bf16.msra.mxu0 0
    %86 = vmatprep.subr.bf16.mxu0 0
    %87 = vmatpush1.bf16.msra.mxu0 0
    %88 = vmatprep.subr.bf16.mxu0 0
    %89 = vmatpush1.bf16.msra.mxu0 0
    %90 = vmatprep.subr.bf16.mxu0 0
    %91 = vmatpush1.bf16.msra.mxu0 0
    %92 = vmatprep.subr.bf16.mxu0 0
    %93 = vmatpush1.bf16.msra.mxu0 0
    %94 = vmatprep.subr.bf16.mxu0 0
    %95 = vmatpush1.bf16.msra.mxu0 0
    %96 = vmatprep.subr.bf16.mxu0 0
    %97 = vmatpush1.bf16.msra.mxu0 0
    %98 = vmatprep.subr.bf16.mxu0 0
    %99 = vmatpush1.bf16.msra.mxu0 0
    %100 = vmatprep.subr.bf16.mxu0 0
    %101 = vmatpush1.bf16.msra.mxu0 0
    %102 = vmatprep.subr.bf16.mxu0 0
    %103 = vmatpush1.bf16.msra.mxu0 0
    %104 = vmatprep.subr.bf16.mxu0 0
    %105 = vmatpush1.bf16.msra.mxu0 0
    %106 = vmatprep.mubr.bf16.mxu0 0
    %107 = vmatmul.mubr.bf16.gmra.mrb[0].mxu0 %v72
    %v108 = vpop.f32.mrb[0].mxu0
    %v109 = vadd.f32 %v56, %v108
    %v110 = vpop.f32.mrb[0].mxu0
    %v111 = vpop.f32.mrb[0].mxu0
    %v112 = vadd.f32 %v56, %v111
    %v113 = vpop.f32.mrb[0].mxu0
    %114 = vdwg.mxu0
    %115 = vmax.xlane.f32.xlu0 %v109
    %v116 = vpop.xlane.xlu0 %115
    %117 = vmax.xlane.f32.xlu0 %v112
    %v118 = vpop.xlane.xlu0 %117
    %v119 = vsub.f32 %v109, %v116
    %v120 = vsub.f32 %v112, %v118
    %v121 = vmul.f32 %v119, 1.442695
    %v122 = vpow.pop %v121
    %v123 = vmul.f32 %v120, 1.442695
    %v124 = vpow.pop %v123
    %125 = vadd.xlane.f32.xlu0 %v122
    %v126 = vpop.xlane.xlu0 %125
    %127 = vadd.xlane.f32.xlu0 %v124
    %v128 = vpop.xlane.xlu0 %127
    %v129 = vlog2.pop %v126
    %v130 = vmul.f32 %v129, 0.6931472
    %v131 = vlog2.pop %v128
    %v132 = vmul.f32 %v131, 0.6931472
    %v133 = vsub.f32 %v119, %v130
    %v134 = vsub.f32 %v120, %v132
    %135 = vst [vmem:[#allocation7] sm:$0xff] %v133
    %136 = vst [vmem:[#allocation7 + $0x8] sm:$0xff] %v134
    // Predicated region
    $region22: #{generator_forward.1} parent=1 // pred_check
      _
    $region23: #{generator_forward.1} parent=1 // pred_check_branch
      %138 = sbr.rel (0) target = $region25
    $region24: #{generator_forward.1} parent=1 // pred_region
      %s140 = ssub.s32 256, 256
      %141 = vsyncadd [#allocation4], %s140
      %s142 = sshll.u32 [#allocation7], 4
      %s143 = int_to_ptr.vmem [resolvable:$true] %s142
      %148 = dma.vmem_to_hbm [thread:$0]  %s143, 256, %s3, [#allocation4], 128, 128, 8
    $region25: #{generator_forward.1} parent=1 // pred_fallthru
      _
    // Predicated region
    $region26: #{generator_forward.1} parent=1 // pred_check
      _
    $region27: #{generator_forward.1} parent=1 // pred_check_branch
      %150 = sbr.rel (0) target = $region29
    $region28: #{generator_forward.1} parent=1 // pred_region
      %151 = dma.done [#allocation4], 256
    $region29: #{generator_forward.1} parent=1 // pred_fallthru
      _
    %152 = vsyncpa [#allocation3], 1
    %153 = vsyncpa [#allocation6], 1
    %154 = vsyncpa [#allocation4], 1

</llo_original>
